<compile_context>
chip_gen: v5e
topology: v5e:2x2
jax: 0.10.0
libtpu: 0.0.40
codegen_flags: <defaults>
</compile_context>

<pallas_src>
import functools

import jax
import jax.numpy as jnp
import numpy as np
from jax.experimental import pallas as pl
from jax.experimental.pallas import tpu as pltpu


def _sublane_packing(itemsize):
    # Rows per sublane group: 8 for 4-byte, 16 for 2-byte, 32 for 1-byte dtypes.
    return max(8, 32 // max(int(itemsize), 1))


def _round_up(x, m):
    return (x + m - 1) // m * m


def _sparse_shift_conv_kernel(x_ref, w_ref, m_ref, b_ref, o_ref, *, shift, packing):
    # x_ref : (1, TH, W, C)  activation tile, NHWC
    # w_ref : (C, C)         1x1 conv weight, pre-transposed -> (C_in, C_out)
    # m_ref : (1, C)         channel shift mask (0/1) in activation dtype
    # b_ref : (1, C)         bias (f32)
    # o_ref : (1, TH, W, C)
    x = x_ref[0]                           # (TH, W, C)
    th, w, c = x.shape

    s = shift % w                          # static Python int (torch.roll wrap)
    if s == 0:
        x_rolled = x
    elif w % packing == 0:
        # torch.roll(x, shifts=s, dims=W): out[w] = in[(w - s) mod W].
        # W is the sublane axis in NHWC -> XLU rotate (off the VALU/MXU path).
        x_rolled = pltpu.roll(x, shift=s, axis=1)
    else:
        # TODO(synk): non-sublane-aligned W pays an in-kernel copy here (and in
        # the reshape below); W-aligned callers take the free XLU path.
        x_rolled = jnp.concatenate([x[:, w - s:, :], x[:, :w - s, :]], axis=1)

    # Per-lane select folds the channel mask: shifted channels take the rolled
    # value, the rest keep the original.  Single VPU select per vreg.
    sel = jnp.broadcast_to((m_ref[...] != 0).reshape(1, 1, c), x.shape)
    x_sel = jnp.where(sel, x_rolled, x)

    # (TH, W, C) -> (TH*W, C) is layout-free when W is sublane-aligned.
    x2 = x_sel.reshape(th * w, c)

    # Single MXU matmul (halves MXU work vs the two-weight formulation).
    acc = jnp.dot(x2, w_ref[...], preferred_element_type=jnp.float32)
    acc = acc + b_ref[...]                 # (TH*W, C) + (1, C)
    o_ref[0] = acc.reshape(th, w, c).astype(o_ref.dtype)


def _tpu_budgets():
    """Generation-aware (max_tile_bytes, vmem_limit_floor, vmem_limit_cap)."""
    vmem_phys = None
    try:
        vmem_phys = getattr(pltpu.get_tpu_info(), "vmem_capacity_bytes", None)
    except Exception:
        vmem_phys = None
    if vmem_phys is not None and vmem_phys >= 96 * (1 << 20):
        # v5e / v6e class (128 MiB physical VMEM): big tiles, generous limit.
        return 6 << 20, 32 << 20, 64 << 20
    # v7x class (64 MiB per TensorCore) or unknown: conservative headroom.
    return 3 << 20, 24 << 20, 44 << 20


def _pick_row_tile(B, H, W, C, itemsize, max_tile_bytes, min_steps=8):
    """Largest TH dividing H whose (TH, W, C) tile fits the budget while still
    leaving enough grid steps for pipelining / TensorCore sharding."""
    divisors = [d for d in range(1, H + 1) if H % d == 0]

    def tile_bytes(th):
        return th * W * C * itemsize

    fitting = [d for d in divisors if tile_bytes(d) <= max_tile_bytes]
    if not fitting:
        fitting = [1]          # irreducible minimum without W tiling

    # Largest budget-fitting tile that still gives >= min_steps grid steps
    # (DMA/compute overlap + both v7x TCs busy even at B == 1).
    good = [d for d in fitting if B * (H // d) >= max(min_steps, 2)]
    if good:
        return max(good)
    # Can't reach min_steps: still insist on >= 2 steps when possible.
    two = [d for d in fitting if B * (H // d) >= 2]
    if two:
        return max(two)
    return max(fitting)


def sparse_shift_conv_nhwc(x_nhwc, mask_bool, weight, bias, shift_size=1,
                           *, max_tile_bytes=None):
    """Optimized path: NHWC in, NHWC out -- no layout transposes on the hot path.

    x_nhwc   : (B, H, W, C)
    mask_bool: (C,) bool, True for input channels that get width-shifted.
    weight   : (C, C, 1, 1)  (PyTorch Conv2d layout)
    bias     : (C,)
    """
    B, H, W, C = x_nhwc.shape
    dtype = x_nhwc.dtype
    itemsize = jnp.dtype(dtype).itemsize

    tile_cap, vmem_floor, vmem_cap = _tpu_budgets()
    if max_tile_bytes is None:
        max_tile_bytes = tile_cap

    # Pad C to a lane multiple: unmasked (lane-dense) output stores and a full
    # MXU N dimension.  Padded input channels are zero, padded output channels
    # are sliced off below.
    Cp = max(128, _round_up(C, 128))
    w_t = weight[:, :, 0, 0].T.astype(dtype)             # (C_in, C_out)
    if Cp != C:
        x_in = jnp.pad(x_nhwc, ((0, 0), (0, 0), (0, 0), (0, Cp - C)))
        w_in = jnp.zeros((Cp, Cp), dtype=dtype).at[:C, :C].set(w_t)
        m_in = jnp.zeros((1, Cp), dtype=dtype).at[0, :C].set(mask_bool.astype(dtype))
        b_in = jnp.zeros((1, Cp), dtype=jnp.float32).at[0, :C].set(
            bias.astype(jnp.float32))
    else:
        x_in = x_nhwc
        w_in = w_t
        m_in = mask_bool.astype(dtype).reshape(1, C)
        b_in = bias.astype(jnp.float32).reshape(1, C)

    th = _pick_row_tile(B, H, W, Cp, itemsize, max_tile_bytes)
    grid = (B, H // th)

    # Scoped VMEM: double-buffered in + out activation tiles, plus the
    # grid-invariant weight/mask/bias (constant index_map -> DMA'd once),
    # plus headroom.  Capped per generation.
    tile_b = th * W * Cp * itemsize
    const_b = Cp * Cp * itemsize + Cp * itemsize + Cp * 4
    vmem_limit = int(min(vmem_cap, max(vmem_floor, 4 * tile_b + 2 * const_b + (4 << 20))))

    kernel = functools.partial(_sparse_shift_conv_kernel, shift=shift_size,
                               packing=_sublane_packing(itemsize))

    out = pl.pallas_call(
        kernel,
        out_shape=jax.ShapeDtypeStruct((B, H, W, Cp), dtype),
        grid_spec=pltpu.PrefetchScalarGridSpec(
            num_scalar_prefetch=0,
            grid=grid,
            in_specs=[
                pl.BlockSpec((1, th, W, Cp), lambda b_, h_: (b_, h_, 0, 0)),
                # Grid-invariant operands: constant index_map -> fetched once.
                # (At very large C, pipeline_mode=pl.Buffered(1) would also
                # drop the second VMEM buffer; negligible at these sizes.)
                pl.BlockSpec((Cp, Cp), lambda b_, h_: (0, 0)),
                pl.BlockSpec((1, Cp), lambda b_, h_: (0, 0)),
                pl.BlockSpec((1, Cp), lambda b_, h_: (0, 0)),
            ],
            out_specs=pl.BlockSpec((1, th, W, Cp), lambda b_, h_: (b_, h_, 0, 0)),
        ),
        compiler_params=pltpu.CompilerParams(
            # Both grid axes are independent: shard across TensorCores
            # (matters on v7x: 2 TCs/chip, even when B == 1).
            dimension_semantics=("parallel", "parallel"),
            vmem_limit_bytes=vmem_limit,
        ),
    )(x_in, w_in, m_in, b_in)

    return out[..., :C] if Cp != C else out


def sparse_shift_conv(x_nchw, mask_bool, weight, bias, shift_size=1):
    """Drop-in NCHW variant matching the PyTorch module's calling convention.

    The two transposes are boundary glue only; NHWC-native callers should use
    sparse_shift_conv_nhwc directly (removes ~2/3 of HBM traffic of this
    memory-bound op).
    """
    # TODO(synk): for NCHW-bound callers, fold the layout change into the
    # BlockSpec index_map instead of standalone XLA transposes.
    x_nhwc = jnp.transpose(x_nchw, (0, 2, 3, 1))
    out_nhwc = sparse_shift_conv_nhwc(x_nhwc, mask_bool, weight, bias, shift_size)
    return jnp.transpose(out_nhwc, (0, 3, 1, 2))


def _reference_nhwc(x, mask, weight, bias, shift_size):
    x_shift = jnp.where(mask[None, None, None, :],
                        jnp.roll(x, shift=shift_size, axis=2), x)
    w = weight[:, :, 0, 0]                               # (C_out, C_in)
    out = jnp.einsum("bhwc,oc->bhwo", x_shift, w,
                     precision=jax.lax.Precision.HIGHEST)
    return out + bias[None, None, None, :]


def _reference_nchw(x, mask, weight, bias, shift_size):
    x_shift = jnp.where(mask[None, :, None, None],
                        jnp.roll(x, shift=shift_size, axis=3), x)
    w = weight[:, :, 0, 0]
    out = jnp.einsum("bchw,oc->bohw", x_shift, w,
                     precision=jax.lax.Precision.HIGHEST)
    return out + bias[None, :, None, None]


if __name__ == "__main__":
    key = jax.random.PRNGKey(0)
    kx, kw, kb, kperm = jax.random.split(key, 4)

    def make_mask(kp, C, sparsity=0.5):
        perm = jax.random.permutation(kp, C)
        sel = perm[: int(C * sparsity)]
        return jnp.zeros((C,), dtype=bool).at[sel].set(True)

    def check(out, ref, rtol=1e-5, atol=1e-5):
        np.testing.assert_allclose(np.asarray(out), np.asarray(ref),
                                   rtol=rtol, atol=atol)

    # Base shapes: B=2, C=128, H=W=16, f32 (lane-aligned C -> no padding).
    B, C, H, W = 2, 128, 16, 16
    x_nhwc = jax.random.normal(kx, (B, H, W, C), dtype=jnp.float32)
    weight = jax.random.normal(kw, (C, C, 1, 1), dtype=jnp.float32) * 0.1
    bias = jax.random.normal(kb, (C,), dtype=jnp.float32) * 0.1
    mask = make_mask(kperm, C)

    # 1) Optimized NHWC path, shift=1 (XLU roll branch).
    out = jax.block_until_ready(sparse_shift_conv_nhwc(x_nhwc, mask, weight, bias, 1))
    check(out, _reference_nhwc(x_nhwc, mask, weight, bias, 1))

    # 2) shift > 1 and negative shift (torch.roll wrap semantics).
    for s in (3, -2):
        out = jax.block_until_ready(
            sparse_shift_conv_nhwc(x_nhwc, mask, weight, bias, s))
        check(out, _reference_nhwc(x_nhwc, mask, weight, bias, s))

    # 3) Non-sublane-aligned W (concat fallback) + non-lane-aligned C (pad path).
    C2, W2 = 96, 12
    k1, k2, k3, k4 = jax.random.split(jax.random.PRNGKey(0), 4)
    x2 = jax.random.normal(k1, (B, H, W2, C2), dtype=jnp.float32)
    w2 = jax.random.normal(k2, (C2, C2, 1, 1), dtype=jnp.float32) * 0.1
    b2 = jax.random.normal(k3, (C2,), dtype=jnp.float32) * 0.1
    m2 = make_mask(k4, C2)
    out2 = jax.block_until_ready(sparse_shift_conv_nhwc(x2, m2, w2, b2, 2))
    check(out2, _reference_nhwc(x2, m2, w2, b2, 2))

    # 4) bf16 activations/weights (halves HBM bytes; MXU runs bf16, f32 acc).
    xb = x_nhwc.astype(jnp.bfloat16)
    outb = jax.block_until_ready(sparse_shift_conv_nhwc(xb, mask, weight, bias, 1))
    refb = _reference_nhwc(xb.astype(jnp.float32), mask,
                           weight.astype(jnp.bfloat16).astype(jnp.float32), bias, 1)
    check(outb.astype(jnp.float32), refb, rtol=2e-2, atol=2e-2)

    # 5) Tiny VMEM budget forces finer H-tiling (TH < default).
    outt = jax.block_until_ready(
        sparse_shift_conv_nhwc(x_nhwc, mask, weight, bias, 1,
                               max_tile_bytes=16 * 1024))
    check(outt, _reference_nhwc(x_nhwc, mask, weight, bias, 1))

    # 6) NCHW drop-in wrapper: parity with the PyTorch module layout.
    x_nchw = jnp.transpose(x_nhwc, (0, 3, 1, 2))
    outc = jax.block_until_ready(sparse_shift_conv(x_nchw, mask, weight, bias, 1))
    check(outc, _reference_nchw(x_nchw, mask, weight, bias, 1))

    print("KERNEL_OK")
</pallas_src>

<mosaic_0001>
module attributes {stable_mosaic.version = 11 : i64} {
  func.func @_sparse_shift_conv_kernel(%arg0: i32, %arg1: i32, %arg2: memref<1x4x16x128xf32, #tpu.memory_space<vmem>>, %arg3: memref<128x128xf32, #tpu.memory_space<vmem>>, %arg4: memref<1x128xf32, #tpu.memory_space<vmem>>, %arg5: memref<1x128xf32, #tpu.memory_space<vmem>>, %arg6: memref<1x4x16x128xf32, #tpu.memory_space<vmem>>) attributes {dimension_semantics = [#tpu.dimension_semantics<parallel>, #tpu.dimension_semantics<parallel>], iteration_bounds = array<i64: 2, 4>, scalar_prefetch = 0 : i64, scratch_operands = 0 : i64, tpu.core_type = #tpu.core_type<tc>, window_params = [{transform_indices = @transform_0, window_bounds = array<i64: 1, 4, 16, 128>}, {pipeline_mode = #tpu.pipeline_mode<synchronous>, transform_indices = @transform_1, window_bounds = array<i64: 128, 128>}, {pipeline_mode = #tpu.pipeline_mode<synchronous>, transform_indices = @transform_2, window_bounds = array<i64: 1, 128>}, {pipeline_mode = #tpu.pipeline_mode<synchronous>, transform_indices = @transform_3, window_bounds = array<i64: 1, 128>}, {transform_indices = @transform_4, window_bounds = array<i64: 1, 4, 16, 128>}]} {
    %c0 = arith.constant 0 : index
    %c0_0 = arith.constant 0 : index
    %c0_1 = arith.constant 0 : index
    %c0_2 = arith.constant 0 : index
    %0 = vector.load %arg2[%c0, %c0_0, %c0_1, %c0_2] : memref<1x4x16x128xf32, #tpu.memory_space<vmem>>, vector<1x4x16x128xf32>
    %1 = vector.shape_cast %0 : vector<1x4x16x128xf32> to vector<4x16x128xf32>
    %c1_i32 = arith.constant 1 : i32
    %2 = tpu.dynamic_rotate %1 by %c1_i32 dim 1 : vector<4x16x128xf32>, i32 -> vector<4x16x128xf32>
    %c0_3 = arith.constant 0 : index
    %c0_4 = arith.constant 0 : index
    %3 = vector.load %arg4[%c0_3, %c0_4] : memref<1x128xf32, #tpu.memory_space<vmem>>, vector<1x128xf32>
    %cst = arith.constant 0.000000e+00 : f32
    %4 = vector.broadcast %cst : f32 to vector<1x128xf32>
    %5 = arith.cmpf one, %3, %4 : vector<1x128xf32>
    %6 = vector.shape_cast %5 : vector<1x128xi1> to vector<1x1x128xi1>
    %7 = vector.shape_cast %6 : vector<1x1x128xi1> to vector<1x1x128xi1>
    %8 = vector.broadcast %7 : vector<1x1x128xi1> to vector<4x16x128xi1>
    %9 = arith.select %8, %2, %1 : vector<4x16x128xi1>, vector<4x16x128xf32>
    %10 = vector.shape_cast %9 : vector<4x16x128xf32> to vector<64x128xf32>
    %c0_5 = arith.constant 0 : index
    %c0_6 = arith.constant 0 : index
    %11 = vector.load %arg3[%c0_5, %c0_6] : memref<128x128xf32, #tpu.memory_space<vmem>>, vector<128x128xf32>
    %cst_7 = arith.constant dense<0.000000e+00> : vector<64x128xf32>
    %12 = tpu.matmul %10, %11, %cst_7 {dimension_numbers = #tpu.dot_dimension_numbers<[1], [0], [0], [1], [0, 0, 1, 1], [], []>} : vector<64x128xf32>, vector<128x128xf32>, vector<64x128xf32> -> vector<64x128xf32>
    %c0_8 = arith.constant 0 : index
    %c0_9 = arith.constant 0 : index
    %13 = vector.load %arg5[%c0_8, %c0_9] : memref<1x128xf32, #tpu.memory_space<vmem>>, vector<1x128xf32>
    %14 = vector.broadcast %13 : vector<1x128xf32> to vector<64x128xf32>
    %15 = arith.addf %12, %14 : vector<64x128xf32>
    %16 = vector.shape_cast %15 : vector<64x128xf32> to vector<4x16x128xf32>
    %c0_10 = arith.constant 0 : index
    %c0_11 = arith.constant 0 : index
    %c0_12 = arith.constant 0 : index
    %c0_13 = arith.constant 0 : index
    %17 = vector.load %arg6[%c0_10, %c0_11, %c0_12, %c0_13] : memref<1x4x16x128xf32, #tpu.memory_space<vmem>>, vector<1x4x16x128xf32>
    %18 = vector.shape_cast %17 : vector<1x4x16x128xf32> to vector<4x16x128xf32>
    %19 = vector.shape_cast %16 : vector<4x16x128xf32> to vector<1x4x16x128xf32>
    tpu.vector_store %arg6[%c0_10, %c0_11, %c0_12, %c0_13], %19 {strides = array<i32>} : memref<1x4x16x128xf32, #tpu.memory_space<vmem>>, vector<1x4x16x128xf32>,
    return
  }
  func.func @transform_0(%arg0: i32, %arg1: i32) -> (i32, i32, i32, i32) {
    %c0_i32 = arith.constant 0 : i32
    %c0_i32_0 = arith.constant 0 : i32
    %c0_i32_1 = arith.constant 0 : i32
    return %arg0, %arg1, %c0_i32, %c0_i32_0 : i32, i32, i32, i32
  }
  func.func @transform_1(%arg0: i32, %arg1: i32) -> (i32, i32) {
    %c0_i32 = arith.constant 0 : i32
    %c0_i32_0 = arith.constant 0 : i32
    %c0_i32_1 = arith.constant 0 : i32
    return %c0_i32, %c0_i32_0 : i32, i32
  }
  func.func @transform_2(%arg0: i32, %arg1: i32) -> (i32, i32) {
    %c0_i32 = arith.constant 0 : i32
    %c0_i32_0 = arith.constant 0 : i32
    %c0_i32_1 = arith.constant 0 : i32
    return %c0_i32, %c0_i32_0 : i32, i32
  }
  func.func @transform_3(%arg0: i32, %arg1: i32) -> (i32, i32) {
    %c0_i32 = arith.constant 0 : i32
    %c0_i32_0 = arith.constant 0 : i32
    %c0_i32_1 = arith.constant 0 : i32
    return %c0_i32, %c0_i32_0 : i32, i32
  }
  func.func @transform_4(%arg0: i32, %arg1: i32) -> (i32, i32, i32, i32) {
    %c0_i32 = arith.constant 0 : i32
    %c0_i32_0 = arith.constant 0 : i32
    %c0_i32_1 = arith.constant 0 : i32
    return %arg0, %arg1, %c0_i32, %c0_i32_0 : i32, i32, i32, i32
  }
}

</mosaic_0001>

<llo_original>
// kernel: tpu_custom_call.1
$region0: #{tpu_custom_call.1}
  #allocation0 [shape = 'u32[]', space=smem, size = 0x4, offset = 0x4, fixed_abs, tag = 'smem constant byte address 0x4 - core index']
  #allocation1 [shape = 'u32[72,128]{1,0:T(1,128)}', space=vmem, size = 0x9000, scoped, tag = 'internal scratch']
  %s0 = inlined_call_operand.hbm [shape: f32[2,16,16,128], index: 0, kind: input, shape index: {}]
  %s1 = inlined_call_operand.hbm [shape: f32[128,128], index: 1, kind: input, shape index: {}]
  %s2 = inlined_call_operand.vmem [shape: f32[1,128], index: 2, kind: input, shape index: {}]
  %s3 = inlined_call_operand.vmem [shape: f32[1,128], index: 3, kind: input, shape index: {}]
  %s4 = inlined_call_operand.hbm [shape: f32[2,16,16,128], index: 4, kind: output, shape index: {}]
  %s5 = sld [smem:[#allocation0]]
  $region57: #{tpu_custom_call.1} parent=0
    _
  %s7 = ssub.s32 1, %s5
  %s8 = scalar_select 0, %s7, %s5
  $region1: #{tpu_custom_call.1} parent=0
    #allocation2 [shape = 'u8[65536]{0}', space=vmem, size = 0x10000, scoped, tag = 'input window, operand 0']
    #allocation3 [shape = 's32[2]{0}', space=sflag, size = 0x8, scoped, tag = 'scoped memory for tpu_custom_call.1']
    #allocation4 [shape = 's32[2]{0}', space=sflag, size = 0x8, scoped, tag = 'scoped memory for tpu_custom_call.1']
    #allocation5 [shape = 'u8[65536]{0}', space=vmem, size = 0x10000, scoped, tag = 'input window, operand 1, single buffered']
    #allocation6 [shape = 's32[1]{0}', space=sflag, size = 0x4, scoped, tag = 'scoped memory for tpu_custom_call.1']
    #allocation7 [shape = 'u8[65536]{0}', space=vmem, size = 0x10000, scoped, tag = 'output window, operand 0']
    %9 = vsyncpa [#allocation3], 0
    %s10 = scalar_lea.sflag [#allocation3], 1
    %11 = vsyncpa %s10, 0
    %12 = vsyncpa [#allocation6], 0
    %13 = vsyncpa [#allocation4], 0
    %s14 = scalar_lea.sflag [#allocation4], 1
    %15 = vsyncpa %s14, 0
    loop: start=0, step=1, limit=10
    $region2: #{tpu_custom_call.1} parent=1 // loop_pre_header
      _
    $region3: #{tpu_custom_call.1} parent=1 // loop_header
      %s17 = sphi 0, %s21
      %p18 = scmp.ge.s32.totalorder %s17, 10
      %s24 = sphi 0, %s36
      %s25 = sphi 0, %s32
      %s26 = sphi 0, %s24
      %s27 = sphi 0, %s25
      %s28 = sphi 0, %s26
      %s29 = sphi 0, %s27
      %s41 = sphi 0, %s43
      %s44 = sphi 0, %s41
      %s45 = sphi 0, %s44
      %s61 = sphi 0, %s45
      %s65 = sphi 0, %s65
      %s67 = sphi 0, %s65
      %s68 = sphi 0, %s67
      %s82 = sphi 0, %s68
      %s86 = sphi 0, %s86
      %s88 = sphi 0, %s86
      %s89 = sphi 0, %s88
      %s103 = sphi 0, %s89
      %s107 = sphi 0, %s107
      %s109 = sphi 0, %s107
      %s110 = sphi 0, %s109
      %s124 = sphi 0, %s110
      %s132 = sphi 0, %s134
      %s135 = sphi 0, %s132
      %s136 = sphi 0, %s135
      %s152 = sphi 0, %s136
    $region4: #{tpu_custom_call.1} parent=1 // loop_header_branch
      %20 = sbr.rel (%p18) target = $region8
    $region5: #{tpu_custom_call.1} parent=1 // loop_body
      %s22 = ssub.s32 %s17, 1
      %s23 = ssub.s32 %s17, 2
      %s30 = sadd.s32 1, %s25
      %p31 = scmp.ge.s32.totalorder %s30, 4
      %s32 = scalar_select %p31, 0, %s30
      %s33 = sadd.s32 1, %s24
      %s34 = scalar_select %p31, %s33, %s24
      %p35 = scmp.ge.s32.totalorder %s34, 2
      %s36 = scalar_select %p35, 0, %s34
      %s37 = ssub.s32 %s24, %s36
      %s38 = ssub.s32 %s25, %s32
      %s39 = sor.u32 %s37, %s38
      %p40 = scmp.eq.s32.totalorder %s39, 0
      %s42 = sadd.s32 %s41, 1
      %s43 = scalar_select %p40, %s41, %s42
      %p46 = pneg %p40
      %p47 = scmp.eq.s32.totalorder %s17, 7
      %p48 = por %p46, %p47
      %p49 = scmp.ne.s32.totalorder %s41, %s44
      %p50 = scmp.eq.s32.totalorder %s17, 0
      %p51 = por %p49, %p50
      %p52 = scmp.ne.s32.totalorder %s41, %s44
      %p53 = scmp.eq.s32.totalorder %s22, 7
      %p54 = por %p52, %p53
      %p55 = scmp.ne.s32.totalorder %s44, %s45
      %p56 = scmp.eq.s32.totalorder %s22, 0
      %p57 = por %p55, %p56
      %p58 = scmp.ne.s32.totalorder %s44, %s45
      %p59 = scmp.eq.s32.totalorder %s23, 7
      %p60 = por %p58, %p59
      %p62 = scmp.ne.s32.totalorder %s45, %s61
      %p63 = scmp.eq.s32.totalorder %s23, 0
      %p64 = por %p62, %p63
      %s66 = sadd.s32 %s65, 1
      %p69 = scmp.eq.s32.totalorder %s17, 7
      %p70 = scmp.ne.s32.totalorder %s65, %s67
      %p71 = scmp.eq.s32.totalorder %s17, 0
      %p72 = por %p70, %p71
      %p73 = scmp.ne.s32.totalorder %s65, %s67
      %p74 = scmp.eq.s32.totalorder %s22, 7
      %p75 = por %p73, %p74
      %p76 = scmp.ne.s32.totalorder %s67, %s68
      %p77 = scmp.eq.s32.totalorder %s22, 0
      %p78 = por %p76, %p77
      %p79 = scmp.ne.s32.totalorder %s67, %s68
      %p80 = scmp.eq.s32.totalorder %s23, 7
      %p81 = por %p79, %p80
      %p83 = scmp.ne.s32.totalorder %s68, %s82
      %p84 = scmp.eq.s32.totalorder %s23, 0
      %p85 = por %p83, %p84
      %s87 = sadd.s32 %s86, 1
      %p90 = scmp.eq.s32.totalorder %s17, 7
      %p91 = scmp.ne.s32.totalorder %s86, %s88
      %p92 = scmp.eq.s32.totalorder %s17, 0
      %p93 = por %p91, %p92
      %p94 = scmp.ne.s32.totalorder %s86, %s88
      %p95 = scmp.eq.s32.totalorder %s22, 7
      %p96 = por %p94, %p95
      %p97 = scmp.ne.s32.totalorder %s88, %s89
      %p98 = scmp.eq.s32.totalorder %s22, 0
      %p99 = por %p97, %p98
      %p100 = scmp.ne.s32.totalorder %s88, %s89
      %p101 = scmp.eq.s32.totalorder %s23, 7
      %p102 = por %p100, %p101
      %p104 = scmp.ne.s32.totalorder %s89, %s103
      %p105 = scmp.eq.s32.totalorder %s23, 0
      %p106 = por %p104, %p105
      %s108 = sadd.s32 %s107, 1
      %p111 = scmp.eq.s32.totalorder %s17, 7
      %p112 = scmp.ne.s32.totalorder %s107, %s109
      %p113 = scmp.eq.s32.totalorder %s17, 0
      %p114 = por %p112, %p113
      %p115 = scmp.ne.s32.totalorder %s107, %s109
      %p116 = scmp.eq.s32.totalorder %s22, 7
      %p117 = por %p115, %p116
      %p118 = scmp.ne.s32.totalorder %s109, %s110
      %p119 = scmp.eq.s32.totalorder %s22, 0
      %p120 = por %p118, %p119
      %p121 = scmp.ne.s32.totalorder %s109, %s110
      %p122 = scmp.eq.s32.totalorder %s23, 7
      %p123 = por %p121, %p122
      %p125 = scmp.ne.s32.totalorder %s110, %s124
      %p126 = scmp.eq.s32.totalorder %s23, 0
      %p127 = por %p125, %p126
      %s128 = ssub.s32 %s24, %s36
      %s129 = ssub.s32 %s25, %s32
      %s130 = sor.u32 %s128, %s129
      %p131 = scmp.eq.s32.totalorder %s130, 0
      %s133 = sadd.s32 %s132, 1
      %s134 = scalar_select %p131, %s132, %s133
      %p137 = pneg %p131
      %p138 = scmp.eq.s32.totalorder %s17, 7
      %p139 = por %p137, %p138
      %p140 = scmp.ne.s32.totalorder %s132, %s135
      %p141 = scmp.eq.s32.totalorder %s17, 0
      %p142 = por %p140, %p141
      %p143 = scmp.ne.s32.totalorder %s132, %s135
      %p144 = scmp.eq.s32.totalorder %s22, 7
      %p145 = por %p143, %p144
      %p146 = scmp.ne.s32.totalorder %s135, %s136
      %p147 = scmp.eq.s32.totalorder %s22, 0
      %p148 = por %p146, %p147
      %p149 = scmp.ne.s32.totalorder %s135, %s136
      %p150 = scmp.eq.s32.totalorder %s23, 7
      %p151 = por %p149, %p150
      %p153 = scmp.ne.s32.totalorder %s136, %s152
      %p154 = scmp.eq.s32.totalorder %s23, 0
      %p155 = por %p153, %p154
      %p156 = scmp.le.s32.totalorder 1, %s17
      %p157 = scmp.lt.s32.totalorder %s17, 9
      %p158 = pnand %p156, %p157
      %p159 = pneg %p158
      // Predicated region
      $region9: #{tpu_custom_call.1} parent=5 // pred_check
        _
      $region10: #{tpu_custom_call.1} parent=5 // pred_check_branch
        %161 = sbr.rel (%p158) target = $region12
      $region11: #{tpu_custom_call.1} parent=5 // pred_region
        %s162 = ssub.s32 %s17, 1
        // Predicated region
        $region13: #{tpu_custom_call.1} parent=11 // pred_check
          %p163 = pneg %p78
        $region14: #{tpu_custom_call.1} parent=11 // pred_check_branch
          %165 = sbr.rel (%p163) target = $region16
        $region15: #{tpu_custom_call.1} parent=11 // pred_region
          %167 = vsyncadd [#allocation6], 0
          %s168 = sshll.u32 %s1, 4
          %s169 = int_to_ptr.hbm [resolvable:$true] %s168
          %s170 = sshll.u32 [#allocation5], 4
          %s171 = int_to_ptr.vmem [resolvable:$true] %s170
          %176 = dma.hbm_to_vmem [thread:$0]  %s169, 2048, %s171, [#allocation6], 128, 128, 8
        $region16: #{tpu_custom_call.1} parent=11 // pred_fallthru
          _
        // Predicated region
        $region17: #{tpu_custom_call.1} parent=11 // pred_check
          %p177 = pneg %p99
        $region18: #{tpu_custom_call.1} parent=11 // pred_check_branch
          %179 = sbr.rel (%p177) target = $region20
        $region19: #{tpu_custom_call.1} parent=11 // pred_region
          _
        $region20: #{tpu_custom_call.1} parent=11 // pred_fallthru
          _
        // Predicated region
        $region21: #{tpu_custom_call.1} parent=11 // pred_check
          %p180 = pneg %p120
        $region22: #{tpu_custom_call.1} parent=11 // pred_check_branch
          %182 = sbr.rel (%p180) target = $region24
        $region23: #{tpu_custom_call.1} parent=11 // pred_region
          _
        $region24: #{tpu_custom_call.1} parent=11 // pred_fallthru
          _
      $region12: #{tpu_custom_call.1} parent=5 // pred_fallthru
        _
      %p183 = scmp.lt.s32.totalorder %s17, 8
      // Predicated region
      $region25: #{tpu_custom_call.1} parent=5 // pred_check
        %p184 = pneg %p183
      $region26: #{tpu_custom_call.1} parent=5 // pred_check_branch
        %186 = sbr.rel (%p184) target = $region28
      $region27: #{tpu_custom_call.1} parent=5 // pred_region
        // Predicated region
        $region29: #{tpu_custom_call.1} parent=27 // pred_check
          %p187 = pneg %p51
        $region30: #{tpu_custom_call.1} parent=27 // pred_check_branch
          %189 = sbr.rel (%p187) target = $region32
        $region31: #{tpu_custom_call.1} parent=27 // pred_region
          %s190 = sand.u32 %s41, 1
          %s191 = scalar_lea.sflag [#allocation3], %s190
          %s192 = sand.u32 %s41, 1
          %s193 = smul.addr %s192, 64
          %s194 = scalar_lea.vmem [#allocation2], %s193
          %s195 = smul.u32 4, %s25
          %197 = vsyncadd %s191, 0
          %s198 = smul.addr %s195, 2
          %s199 = smul.addr %s24, 32
          %s200 = sadd.s32 %s198, %s199
          %s201 = smul.addr %s200, 8
          %s202 = scalar_lea.hbm %s0, %s201
          %s203 = sshll.u32 %s202, 4
          %s204 = int_to_ptr.hbm [resolvable:$true] %s203
          %s205 = sshll.u32 %s194, 4
          %s206 = int_to_ptr.vmem [resolvable:$true] %s205
          %211 = dma.hbm_to_vmem [thread:$0]  %s204, 1024, %s206, %s191, 128, 128, 8
        $region32: #{tpu_custom_call.1} parent=27 // pred_fallthru
          _
      $region28: #{tpu_custom_call.1} parent=5 // pred_fallthru
        _
      %p212 = scmp.le.s32.totalorder 1, %s17
      %p213 = scmp.lt.s32.totalorder %s17, 9
      %p214 = pnand %p212, %p213
      %p215 = pneg %p214
      // Predicated region
      $region33: #{tpu_custom_call.1} parent=5 // pred_check
        _
      $region34: #{tpu_custom_call.1} parent=5 // pred_check_branch
        %217 = sbr.rel (%p214) target = $region36
      $region35: #{tpu_custom_call.1} parent=5 // pred_region
        %s218 = ssub.s32 %s17, 1
        %s219 = sand.u32 %s44, 1
        %s220 = scalar_lea.sflag [#allocation3], %s219
        %s221 = sand.u32 %s44, 1
        %s222 = smul.addr %s221, 64
        %s223 = scalar_lea.vmem [#allocation2], %s222
        // Predicated region
        $region37: #{tpu_custom_call.1} parent=35 // pred_check
          %p224 = pneg %p57
        $region38: #{tpu_custom_call.1} parent=35 // pred_check_branch
          %226 = sbr.rel (%p224) target = $region40
        $region39: #{tpu_custom_call.1} parent=35 // pred_region
          %228 = dma.done %s220, 1024
        $region40: #{tpu_custom_call.1} parent=35 // pred_fallthru
          _
        // Predicated region
        $region41: #{tpu_custom_call.1} parent=35 // pred_check
          %p229 = pneg %p78
        $region42: #{tpu_custom_call.1} parent=35 // pred_check_branch
          %231 = sbr.rel (%p229) target = $region44
        $region43: #{tpu_custom_call.1} parent=35 // pred_region
          %233 = dma.done [#allocation6], 2048
        $region44: #{tpu_custom_call.1} parent=35 // pred_fallthru
          _
        %s234 = sand.u32 %s44, 1
        %s235 = scalar_lea.sflag [#allocation3], %s234
        %s236 = sand.u32 %s44, 1
        %s237 = smul.addr %s236, 64
        %s238 = scalar_lea.vmem [#allocation2], %s237
        %p239 = pneg %p57
        %p240 = pneg %p54
        %p241 = pneg %p78
        %p242 = pneg %p75
        %p243 = pneg %p99
        %p244 = pneg %p96
        %p245 = pneg %p120
        %p246 = pneg %p117
        %p247 = pneg %p148
        %p248 = pneg %p145
        %s249 = sand.u32 %s135, 1
        %s250 = scalar_lea.sflag [#allocation4], %s249
        %s251 = sand.u32 %s135, 1
        %s252 = smul.addr %s251, 64
        %s253 = scalar_lea.vmem [#allocation7], %s252
        %s254 = smul.u32 4, %s27
        %s255 = smul.u32 4, %s27
        %v256 = vld [vmem:[%s223] sm:$0xff]
        %v257 = vld [vmem:[%s223 + $0x8] sm:$0xff]
        %v258 = vld [vmem:[%s223 + $0x10] sm:$0xff]
        %v259 = vld [vmem:[%s223 + $0x18] sm:$0xff]
        %v260 = vld [vmem:[%s223 + $0x20] sm:$0xff]
        %v261 = vld [vmem:[%s223 + $0x28] sm:$0xff]
        %v262 = vld [vmem:[%s223 + $0x30] sm:$0xff]
        %v263 = vld [vmem:[%s223 + $0x38] sm:$0xff]
        %v264 = vrot.slane %v256, 7
        %v265 = vrot.slane %v258, 7
        %v266 = vrot.slane %v260, 7
        %v267 = vrot.slane %v262, 7
        %v268 = vrot.slane %v257, 7
        %v269 = vrot.slane %v259, 7
        %v270 = vrot.slane %v261, 7
        %v271 = vrot.slane %v263, 7
        %v272 = vlaneseq
        %v273 = vshrl.u32 %v272, 7
        %vm274 = vcmp.lt.s32.totalorder %v273, 1
        %v275 = vsel %vm274, %v264, %v268
        %v276 = vsel %vm274, %v265, %v269
        %v277 = vsel %vm274, %v266, %v270
        %v278 = vsel %vm274, %v267, %v271
        %v279 = vsel %vm274, %v268, %v264
        %v280 = vsel %vm274, %v269, %v265
        %v281 = vsel %vm274, %v270, %v266
        %v282 = vsel %vm274, %v271, %v267
        %v283 = vld [vmem:[%s2] sm:$0x1]
        %vm284 = vcmp.ne.f32.partialorder %v283, 0.0
        %v285 = vsel %vm284, 1, 0
        %v286 = vperm.slane %v285, 0
        %vm287 = vcmp.eq.s32.totalorder %v286, 1
        %v288 = vsel %vm287, %v279, %v256
        %v289 = vsel %vm287, %v275, %v257
        %v290 = vsel %vm287, %v280, %v258
        %v291 = vsel %vm287, %v276, %v259
        %v292 = vsel %vm287, %v281, %v260
        %v293 = vsel %vm287, %v277, %v261
        %v294 = vsel %vm287, %v282, %v262
        %v295 = vsel %vm287, %v278, %v263
        %v296 = vld [vmem:[#allocation5] sm:$0xff]
        %v297 = vld [vmem:[#allocation5 + $0x8] sm:$0xff]
        %v298 = vld [vmem:[#allocation5 + $0x10] sm:$0xff]
        %v299 = vld [vmem:[#allocation5 + $0x18] sm:$0xff]
        %v300 = vld [vmem:[#allocation5 + $0x20] sm:$0xff]
        %v301 = vld [vmem:[#allocation5 + $0x28] sm:$0xff]
        %v302 = vld [vmem:[#allocation5 + $0x30] sm:$0xff]
        %v303 = vld [vmem:[#allocation5 + $0x38] sm:$0xff]
        %v304 = vld [vmem:[#allocation5 + $0x40] sm:$0xff]
        %v305 = vld [vmem:[#allocation5 + $0x48] sm:$0xff]
        %v306 = vld [vmem:[#allocation5 + $0x50] sm:$0xff]
        %v307 = vld [vmem:[#allocation5 + $0x58] sm:$0xff]
        %v308 = vld [vmem:[#allocation5 + $0x60] sm:$0xff]
        %v309 = vld [vmem:[#allocation5 + $0x68] sm:$0xff]
        %v310 = vld [vmem:[#allocation5 + $0x70] sm:$0xff]
        %v311 = vld [vmem:[#allocation5 + $0x78] sm:$0xff]
        %v312 = vld [vmem:[%s3] sm:$0x1]
        %v314 = vperm.slane %v312, 0
        %316 = vmatpush.msra.mxu0 %v311
        %317 = vmatpush.msra.mxu0 %v310
        %318 = vmatpush.msra.mxu0 %v309
        %319 = vmatpush.msra.mxu0 %v308
        %320 = vmatpush.msra.mxu0 %v307
        %321 = vmatpush.msra.mxu0 %v306
        %322 = vmatpush.msra.mxu0 %v305
        %323 = vmatpush.msra.mxu0 %v304
        %324 = vmatpush.msra.mxu0 %v303
        %325 = vmatpush.msra.mxu0 %v302
        %326 = vmatpush.msra.mxu0 %v301
        %327 = vmatpush.msra.mxu0 %v300
        %328 = vmatpush.msra.mxu0 %v299
        %329 = vmatpush.msra.mxu0 %v298
        %330 = vmatpush.msra.mxu0 %v297
        %331 = vmatpush.msra.mxu0 %v296
        %332 = vmatmul.f32.gmra.mxu0 %v288
        %v333 = vpop.f32.mrf.mxu0
        %v334 = vadd.f32 %v314, %v333
        %335 = vmatmul.f32.gmra.mxu0 %v289
        %v336 = vpop.f32.mrf.mxu0
        %v337 = vadd.f32 %v314, %v336
        %338 = vmatmul.f32.gmra.mxu0 %v290
        %v339 = vpop.f32.mrf.mxu0
        %v340 = vadd.f32 %v314, %v339
        %341 = vmatmul.f32.gmra.mxu0 %v291
        %v342 = vpop.f32.mrf.mxu0
        %v343 = vadd.f32 %v314, %v342
        %344 = vmatmul.f32.gmra.mxu0 %v292
        %v345 = vpop.f32.mrf.mxu0
        %v346 = vadd.f32 %v314, %v345
        %347 = vmatmul.f32.gmra.mxu0 %v293
        %v348 = vpop.f32.mrf.mxu0
        %v349 = vadd.f32 %v314, %v348
        %350 = vmatmul.f32.gmra.mxu0 %v294
        %v351 = vpop.f32.mrf.mxu0
        %v352 = vadd.f32 %v314, %v351
        %353 = vmatmul.f32.gmra.mxu0 %v295
        %v354 = vpop.f32.mrf.mxu0
        %v355 = vadd.f32 %v314, %v354
        %356 = vdwg.mxu0
        %357 = vst [vmem:[%s253] sm:$0xff] %v334
        %358 = vst [vmem:[%s253 + $0x8] sm:$0xff] %v337
        %359 = vst [vmem:[%s253 + $0x10] sm:$0xff] %v340
        %360 = vst [vmem:[%s253 + $0x18] sm:$0xff] %v343
        %361 = vst [vmem:[%s253 + $0x20] sm:$0xff] %v346
        %362 = vst [vmem:[%s253 + $0x28] sm:$0xff] %v349
        %363 = vst [vmem:[%s253 + $0x30] sm:$0xff] %v352
        %364 = vst [vmem:[%s253 + $0x38] sm:$0xff] %v355
        %s365 = sand.u32 %s135, 1
        %s366 = scalar_lea.sflag [#allocation4], %s365
        %s367 = sand.u32 %s135, 1
        %s368 = smul.addr %s367, 64
        %s369 = scalar_lea.vmem [#allocation7], %s368
        // Predicated region
        $region45: #{tpu_custom_call.1} parent=35 // pred_check
          %p370 = pneg %p145
        $region46: #{tpu_custom_call.1} parent=35 // pred_check_branch
          %372 = sbr.rel (%p370) target = $region48
        $region47: #{tpu_custom_call.1} parent=35 // pred_region
          %s373 = smul.u32 4, %s27
          %375 = vsyncadd %s366, 0
          %s376 = smul.addr %s373, 2
          %s377 = smul.addr %s26, 32
          %s378 = sadd.s32 %s376, %s377
          %s379 = smul.addr %s378, 8
          %s380 = scalar_lea.hbm %s4, %s379
          %s381 = sshll.u32 %s369, 4
          %s382 = int_to_ptr.vmem [resolvable:$true] %s381
          %s383 = sshll.u32 %s380, 4
          %s384 = int_to_ptr.hbm [resolvable:$true] %s383
          %389 = dma.vmem_to_hbm [thread:$0]  %s382, 1024, %s384, %s366, 128, 128, 8
        $region48: #{tpu_custom_call.1} parent=35 // pred_fallthru
          _
      $region36: #{tpu_custom_call.1} parent=5 // pred_fallthru
        _
      %p390 = scmp.le.s32.totalorder 2, %s17
      // Predicated region
      $region49: #{tpu_custom_call.1} parent=5 // pred_check
        %p391 = pneg %p390
      $region50: #{tpu_custom_call.1} parent=5 // pred_check_branch
        %393 = sbr.rel (%p391) target = $region52
      $region51: #{tpu_custom_call.1} parent=5 // pred_region
        %s394 = ssub.s32 %s17, 2
        // Predicated region
        $region53: #{tpu_custom_call.1} parent=51 // pred_check
          %p395 = pneg %p151
        $region54: #{tpu_custom_call.1} parent=51 // pred_check_branch
          %397 = sbr.rel (%p395) target = $region56
        $region55: #{tpu_custom_call.1} parent=51 // pred_region
          %s398 = sand.u32 %s136, 1
          %s399 = scalar_lea.sflag [#allocation4], %s398
          %s400 = sand.u32 %s136, 1
          %s401 = smul.addr %s400, 64
          %s402 = scalar_lea.vmem [#allocation7], %s401
          %404 = dma.done %s399, 1024
        $region56: #{tpu_custom_call.1} parent=51 // pred_fallthru
          _
      $region52: #{tpu_custom_call.1} parent=5 // pred_fallthru
        _
    $region6: #{tpu_custom_call.1} parent=1 // loop_footer
      %s21 = sadd.s32 1, %s17
    $region7: #{tpu_custom_call.1} parent=1 // loop_footer_branch
      %16 = sbr.rel target = $region3
    $region8: #{tpu_custom_call.1} parent=1 // loop_exit
      _
    %405 = vsyncpa [#allocation3], 1
    %s406 = scalar_lea.sflag [#allocation3], 1
    %407 = vsyncpa %s406, 1
    %408 = vsyncpa [#allocation6], 1
    %409 = vsyncpa [#allocation4], 1
    %s410 = scalar_lea.sflag [#allocation4], 1
    %411 = vsyncpa %s410, 1

</llo_original>
